<compile_context>
chip_gen: v7x
topology: tpu7x:2x2x1
jax: 0.10.0
libtpu: 0.0.40
codegen_flags: <defaults>
</compile_context>

<pallas_src>
import numpy as np
import jax
import jax.numpy as jnp
from jax.experimental import pallas as pl
from jax.experimental.pallas import tpu as pltpu


def _identity_kernel(x_ref, o_ref):
    # Pure tile copy — reproduces IdentityMap.forward(x) -> x bit-exactly.
    o_ref[...] = x_ref[...]


_TARGET_BLOCK_BYTES = 4 * 1024 * 1024  # ~4 MiB per block; x4 when in+out are double-buffered


def _sublane_multiple(dtype) -> int:
    # Sub-32-bit dtypes pack along sublanes: 8 rows (f32), 16 (bf16), 32 (int8/fp8).
    itemsize = jnp.dtype(dtype).itemsize
    return max(8, 32 // max(1, itemsize))


def _pick_lane_width(n: int) -> int:
    # Largest "nice" multiple of 128 that divides the flat element count.
    for cand in (4096, 2048, 1024, 512, 256, 128):
        if n % cand == 0:
            return cand
    return 0


def identity_map(x: jax.Array) -> jax.Array:
    """Pallas implementation of IdentityMap.forward: returns x unchanged."""
    n = x.size
    if n == 0:
        return x  # nothing to copy

    orig_shape = x.shape
    dtype = x.dtype
    itemsize = jnp.dtype(dtype).itemsize
    sublane = _sublane_multiple(dtype)
    n_bytes = n * itemsize

    lane = _pick_lane_width(n)
    if lane == 0:
        # TODO(synk): total element count not a multiple of 128 — fall back to a
        # single full-extent (1, n) block (fine for small awkward shapes; large
        # ones should be padded by the caller to a lane-dense size).
        rows, lane, tm = 1, n, 1
        grid_len = 1
    else:
        rows = n // lane
        # Byte-budgeted, dtype-aware row tile.
        tm = (_TARGET_BLOCK_BYTES // (lane * itemsize)) // sublane * sublane
        tm = max(sublane, tm)
        tm = min(tm, rows)  # full-extent block when the slab is small
        grid_len = pl.cdiv(rows, tm)

    flat = x.reshape(rows, lane)

    out = pl.pallas_call(
        _identity_kernel,
        out_shape=jax.ShapeDtypeStruct((rows, lane), dtype),
        grid=(grid_len,),
        in_specs=[pl.BlockSpec((tm, lane), lambda i: (i, 0))],
        out_specs=pl.BlockSpec((tm, lane), lambda i: (i, 0)),
        # Identity needs no new buffer: alias output onto the input.
        input_output_aliases={0: 0},
        # Advisory: this is a pure mem-bound op (worst case 2*N bytes of HBM).
        cost_estimate=pl.CostEstimate(
            flops=0, transcendentals=0, bytes_accessed=2 * n_bytes),
        compiler_params=pltpu.CompilerParams(
            dimension_semantics=("parallel",),   # lets v7x shard rows over 2 TCs
            vmem_limit_bytes=32 * 1024 * 1024,   # safe on v5e/v6e/v7x; fits 4x tile
        ),
    )(flat)

    return out.reshape(orig_shape)


if __name__ == "__main__":
    key = jax.random.PRNGKey(0)

    # Primary case: typical mm_projector input (seq=8, hidden=32), f32.
    x = jax.random.normal(key, (8, 32), dtype=jnp.float32)
    x_host = np.asarray(x)  # snapshot before the (aliasing) kernel call
    y = jax.block_until_ready(identity_map(x))
    assert y.shape == x_host.shape and y.dtype == x_host.dtype
    assert np.array_equal(np.asarray(y), x_host), "identity kernel output mismatch (f32)"

    # bf16, 4-D input: exercises dtype-aware sublane handling + flatten/reshape.
    k2 = jax.random.split(key)[0]
    x2 = jax.random.normal(k2, (2, 4, 16, 16), dtype=jnp.bfloat16)
    x2_host = np.asarray(x2)
    y2 = jax.block_until_ready(identity_map(x2))
    assert y2.shape == x2_host.shape and y2.dtype == x2_host.dtype
    assert np.array_equal(np.asarray(y2), x2_host), "identity kernel output mismatch (bf16)"

    # Awkward size (total not a multiple of 128): exercises the full-extent fallback.
    k3 = jax.random.split(key)[1]
    x3 = jax.random.normal(k3, (5, 7), dtype=jnp.float32)
    x3_host = np.asarray(x3)
    y3 = jax.block_until_ready(identity_map(x3))
    assert y3.shape == x3_host.shape and y3.dtype == x3_host.dtype
    assert np.array_equal(np.asarray(y3), x3_host), "identity kernel output mismatch (fallback)"

    print("KERNEL_OK")
</pallas_src>

<mosaic_0001>
module attributes {stable_mosaic.version = 11 : i64} {
  func.func @_identity_kernel(%arg0: i32, %arg1: memref<1x256xf32, #tpu.memory_space<vmem>>, %arg2: memref<1x256xf32, #tpu.memory_space<vmem>>) attributes {dimension_semantics = [#tpu.dimension_semantics<parallel>], iteration_bounds = array<i64: 1>, scalar_prefetch = 0 : i64, scratch_operands = 0 : i64, tpu.core_type = #tpu.core_type<tc>, window_params = [{transform_indices = @transform_0, window_bounds = array<i64: 1, 256>}, {transform_indices = @transform_1, window_bounds = array<i64: 1, 256>}]} {
    %c0 = arith.constant 0 : index
    %c0_0 = arith.constant 0 : index
    %0 = vector.load %arg1[%c0, %c0_0] : memref<1x256xf32, #tpu.memory_space<vmem>>, vector<1x256xf32>
    %c0_1 = arith.constant 0 : index
    %c0_2 = arith.constant 0 : index
    %1 = vector.load %arg2[%c0_1, %c0_2] : memref<1x256xf32, #tpu.memory_space<vmem>>, vector<1x256xf32>
    tpu.vector_store %arg2[%c0_1, %c0_2], %0 {strides = array<i32>} : memref<1x256xf32, #tpu.memory_space<vmem>>, vector<1x256xf32>,
    return
  }
  func.func @transform_0(%arg0: i32) -> (i32, i32) {
    %c0_i32 = arith.constant 0 : i32
    %c0_i32_0 = arith.constant 0 : i32
    return %arg0, %c0_i32 : i32, i32
  }
  func.func @transform_1(%arg0: i32) -> (i32, i32) {
    %c0_i32 = arith.constant 0 : i32
    %c0_i32_0 = arith.constant 0 : i32
    return %arg0, %c0_i32 : i32, i32
  }
}

</mosaic_0001>

<llo_original>
// kernel: tpu_custom_call.1
$region0: #{tpu_custom_call.1}
  #allocation0 [shape = 'u32[]', space=smem, size = 0x4, offset = 0x4, fixed_abs, tag = 'smem constant byte address 0x4 - core index']
  #allocation1 [shape = 'u32[144,128]{1,0:T(1,128)}', space=vmem, size = 0x12000, scoped, tag = 'internal scratch']
  %s0 = inlined_call_operand.hbm [shape: f32[1,256], index: 0, kind: input, shape index: {}, may-alias: {0,1}]
  %s1 = inlined_call_operand.hbm [shape: f32[1,256], index: 1, kind: output, shape index: {}, may-alias: {0,1}]
  %s2 = sld [smem:[#allocation0]]
  $region18: #{tpu_custom_call.1} parent=0
    _
  %s4 = ssub.s32 1, %s2
  %s5 = scalar_select 0, %s4, %s2
  $region1: #{tpu_custom_call.1} parent=0
    #allocation2 [shape = 'u8[1024]{0}', space=vmem, size = 0x400, scoped, tag = 'input window, operand 0, single buffered']
    #allocation3 [shape = 's32[1]{0}', space=sflag, size = 0x4, scoped, tag = 'scoped memory for tpu_custom_call.1']
    #allocation4 [shape = 's32[1]{0}', space=sflag, size = 0x4, scoped, tag = 'scoped memory for tpu_custom_call.1']
    #allocation5 [shape = 'u8[1024]{0}', space=vmem, size = 0x400, scoped, tag = 'output window, operand 0, single buffered']
    %6 = vsyncpa [#allocation3], 0
    %7 = vsyncpa [#allocation4], 0
    // Predicated region
    $region2: #{tpu_custom_call.1} parent=1 // pred_check
      _
    $region3: #{tpu_custom_call.1} parent=1 // pred_check_branch
      %9 = sbr.rel (0) target = $region5
    $region4: #{tpu_custom_call.1} parent=1 // pred_region
      %s11 = ssub.s32 32, 32
      %12 = vsyncadd [#allocation3], %s11
      %s14 = sshll.u32 [#allocation2], 4
      %s15 = int_to_ptr.vmem [resolvable:$true] %s14
      %17 = dma.hbm_to_vmem [thread:$0]  %s0, 32, %s15, [#allocation3]
    $region5: #{tpu_custom_call.1} parent=1 // pred_fallthru
      _
    // Predicated region
    $region6: #{tpu_custom_call.1} parent=1 // pred_check
      _
    $region7: #{tpu_custom_call.1} parent=1 // pred_check_branch
      %19 = sbr.rel (0) target = $region9
    $region8: #{tpu_custom_call.1} parent=1 // pred_region
      %20 = dma.done [#allocation3], 32
    $region9: #{tpu_custom_call.1} parent=1 // pred_fallthru
      _
    %v21 = vld [vmem:[#allocation2] sm:$0x3]
    %v22 = vlaneseq
    %vm23 = vcmp.ge.s32.totalorder %v22, 0
    %vm24 = vcmp.lt.s32.totalorder %v22, 256
    %vm25 = vmand %vm23, %vm24
    %26 = vst.msk [vmem:[#allocation5] sm:$0x3] %vm25, %v21
    // Predicated region
    $region10: #{tpu_custom_call.1} parent=1 // pred_check
      _
    $region11: #{tpu_custom_call.1} parent=1 // pred_check_branch
      %28 = sbr.rel (0) target = $region13
    $region12: #{tpu_custom_call.1} parent=1 // pred_region
      %s30 = ssub.s32 32, 32
      %31 = vsyncadd [#allocation4], %s30
      %s33 = sshll.u32 [#allocation5], 4
      %s34 = int_to_ptr.vmem [resolvable:$true] %s33
      %36 = dma.vmem_to_hbm [thread:$0]  %s34, 32, %s1, [#allocation4]
    $region13: #{tpu_custom_call.1} parent=1 // pred_fallthru
      _
    // Predicated region
    $region14: #{tpu_custom_call.1} parent=1 // pred_check
      _
    $region15: #{tpu_custom_call.1} parent=1 // pred_check_branch
      %38 = sbr.rel (0) target = $region17
    $region16: #{tpu_custom_call.1} parent=1 // pred_region
      %39 = dma.done [#allocation4], 32
    $region17: #{tpu_custom_call.1} parent=1 // pred_fallthru
      _
    %40 = vsyncpa [#allocation3], 1
    %41 = vsyncpa [#allocation4], 1

</llo_original>
